<compile_context>
chip_gen: v5e
topology: v5e:2x2
jax: 0.10.0
libtpu: 0.0.40
codegen_flags: <defaults>
</compile_context>

<pallas_src>
import math

import jax
import jax.numpy as jnp
from jax.experimental import pallas as pl
from jax.experimental.pallas import tpu as pltpu

HIDDEN = 256
LANE = 128
_MAX_TILE = 2048  # per-step rows; ~8-10 MB VMEM peak at 2048, fine everywhere


def _round_up(x, m):
    return ((x + m - 1) // m) * m


def _num_tensorcores():
    """Best-effort TensorCore count per chip (v7x has 2, v5e/v6e have 1)."""
    try:
        kind = (getattr(jax.devices()[0], "device_kind", "") or "").lower()
        if "v7" in kind:
            return 2
    except Exception:
        pass
    return 1


# --------------------------------------------------------------------------
# Kernel
# --------------------------------------------------------------------------
def actor_kernel(x_ref, w1_ref, b1_ref, w2_ref, b2_ref, w3_ref, b3_ref,
                 scale_ref, bias_ref, o_ref):
    # fc1 + ReLU: bf16 operands on the MXU, f32 accumulate, f32 epilogue,
    # bf16 stored temp (halves vst/vld traffic between matmuls).
    x = x_ref[...].astype(jnp.bfloat16)
    h1 = jnp.dot(x, w1_ref[...], preferred_element_type=jnp.float32)
    h1 = jnp.maximum(h1 + b1_ref[...], 0.0).astype(jnp.bfloat16)
    # fc2 + ReLU
    h2 = jnp.dot(h1, w2_ref[...], preferred_element_type=jnp.float32)
    h2 = jnp.maximum(h2 + b2_ref[...], 0.0).astype(jnp.bfloat16)
    # fc_mu + tanh
    mu = jnp.dot(h2, w3_ref[...], preferred_element_type=jnp.float32)
    mu = jnp.tanh(mu + b3_ref[...])
    # rescale to action range (padded lanes carry scale=bias=0 -> stay 0).
    o_ref[...] = mu * scale_ref[...] + bias_ref[...]


# --------------------------------------------------------------------------
# One-time parameter packing (hoisted out of the per-call path)
# --------------------------------------------------------------------------
def pack_params(params):
    """bf16-cast the matmul weights and zero-pad fc_mu/scale/bias to 128 lanes."""
    w1, b1, w2, b2, w3, b3, scale, bias = params
    act_dim = int(w3.shape[1])
    n_pad = max(LANE, _round_up(act_dim, LANE))
    pc = n_pad - act_dim
    bf16 = jnp.bfloat16
    f32 = jnp.float32
    return {
        "w1": w1.astype(bf16), "b1": b1.astype(f32),
        "w2": w2.astype(bf16), "b2": b2.astype(f32),
        "w3": jnp.pad(w3, ((0, 0), (0, pc))).astype(bf16),
        "b3": jnp.pad(b3, ((0, 0), (0, pc))).astype(f32),
        "scale": jnp.pad(scale, ((0, 0), (0, pc))).astype(f32),
        "bias": jnp.pad(bias, ((0, 0), (0, pc))).astype(f32),
        "act_dim": act_dim,
        "n_pad": n_pad,
    }


def _pick_tile_b(B, num_cores):
    """Large, overhead-amortizing tiles; split across TensorCores on v7x."""
    b16 = _round_up(B, 16)  # bf16 sublane pack
    if num_cores > 1 and b16 > 256:
        per_core = -(-b16 // num_cores)            # ceil divide
        return min(_round_up(per_core, 256), _MAX_TILE)
    return min(b16, _MAX_TILE)


# --------------------------------------------------------------------------
# Wrapper
# --------------------------------------------------------------------------
def actor_forward(x, packed, *, tile_b=None, num_cores=None):
    """x: (B, obs_dim) float32.  packed: output of pack_params.
    Returns (B, act_dim) float32."""
    B, obs_dim = x.shape
    act_dim = packed["act_dim"]
    n_pad = packed["n_pad"]

    if num_cores is None:
        num_cores = _num_tensorcores()
    if tile_b is None:
        tile_b = _pick_tile_b(B, num_cores)
    tile_b = max(8, _round_up(tile_b, 8))

    grid = (pl.cdiv(B, tile_b),)

    def rep(shape):  # whole-array block, constant index across the batch grid
        return pl.BlockSpec(shape, lambda i, _n=len(shape): (0,) * _n)

    w1, b1 = packed["w1"], packed["b1"]
    w2, b2 = packed["w2"], packed["b2"]
    w3, b3 = packed["w3"], packed["b3"]
    scale, bias = packed["scale"], packed["bias"]

    out = pl.pallas_call(
        actor_kernel,
        out_shape=jax.ShapeDtypeStruct((B, n_pad), jnp.float32),
        grid_spec=pltpu.PrefetchScalarGridSpec(
            num_scalar_prefetch=0,
            grid=grid,
            in_specs=[
                pl.BlockSpec((tile_b, obs_dim), lambda i: (i, 0)),   # x
                rep(w1.shape), rep(b1.shape),                        # fc1
                rep(w2.shape), rep(b2.shape),                        # fc2
                rep(w3.shape), rep(b3.shape),                        # fc_mu
                rep(scale.shape), rep(bias.shape),                   # action scale/bias
            ],
            out_specs=pl.BlockSpec((tile_b, n_pad), lambda i: (i, 0)),
        ),
        compiler_params=pltpu.CompilerParams(
            dimension_semantics=("parallel",),
            vmem_limit_bytes=32 << 20),
    )(x.astype(jnp.float32), w1, b1, w2, b2, w3, b3, scale, bias)

    # Edge-block garbage rows only exist beyond B (discarded by Pallas); the
    # column slice drops the zero-padded lanes.
    return out[:, :act_dim]


# --------------------------------------------------------------------------
# Init + reference
# --------------------------------------------------------------------------
def init_params(key, obs_dim, act_dim, action_low, action_high):
    """Deterministic init mimicking PyTorch nn.Linear default (uniform +-1/sqrt(fan_in))."""
    ks = jax.random.split(key, 6)

    def linear(kw, kb, fan_in, fan_out):
        bound = 1.0 / math.sqrt(fan_in)
        w = jax.random.uniform(kw, (fan_in, fan_out), jnp.float32, -bound, bound)
        b = jax.random.uniform(kb, (1, fan_out), jnp.float32, -bound, bound)
        return w, b

    w1, b1 = linear(ks[0], ks[1], obs_dim, HIDDEN)
    w2, b2 = linear(ks[2], ks[3], HIDDEN, HIDDEN)
    w3, b3 = linear(ks[4], ks[5], HIDDEN, act_dim)

    scale = ((action_high - action_low) / 2.0).reshape(1, act_dim).astype(jnp.float32)
    bias = ((action_high + action_low) / 2.0).reshape(1, act_dim).astype(jnp.float32)
    return (w1, b1, w2, b2, w3, b3, scale, bias)


def actor_reference(x, params):
    """Reference matching the kernel's precision choices (bf16 matmul operands,
    f32 accumulate / epilogue)."""
    w1, b1, w2, b2, w3, b3, scale, bias = params
    bf16 = jnp.bfloat16
    h = jnp.dot(x.astype(bf16), w1.astype(bf16),
                preferred_element_type=jnp.float32) + b1
    h = jax.nn.relu(h)
    h = jnp.dot(h.astype(bf16), w2.astype(bf16),
                preferred_element_type=jnp.float32) + b2
    h = jax.nn.relu(h)
    mu = jnp.tanh(jnp.dot(h.astype(bf16), w3.astype(bf16),
                          preferred_element_type=jnp.float32) + b3)
    return mu * scale + bias


if __name__ == "__main__":
    key = jax.random.PRNGKey(0)
    k_x, k_p, k_x2, k_x3 = jax.random.split(key, 4)

    # Small synthetic env: obs_dim=16, act_dim=6.
    B, OBS_DIM, ACT_DIM = 8, 16, 6
    action_low = jnp.full((ACT_DIM,), -2.0, jnp.float32)
    action_high = jnp.full((ACT_DIM,), 2.0, jnp.float32)

    params = init_params(k_p, OBS_DIM, ACT_DIM, action_low, action_high)
    packed = pack_params(params)  # one-time weight packing

    # 1) Tiny batch (single grid step).
    x = jax.random.normal(k_x, (B, OBS_DIM), jnp.float32)
    out = jax.block_until_ready(actor_forward(x, packed))
    ref = actor_reference(x, params)
    assert out.shape == (B, ACT_DIM)
    assert jnp.allclose(out, ref, atol=2e-3, rtol=2e-3), \
        float(jnp.max(jnp.abs(out - ref)))

    # 2) Batch that is not a multiple of the tile (edge block handled by Pallas).
    x2 = jax.random.normal(k_x2, (20, OBS_DIM), jnp.float32)
    out2 = jax.block_until_ready(actor_forward(x2, packed))
    ref2 = actor_reference(x2, params)
    assert out2.shape == (20, ACT_DIM)
    assert jnp.allclose(out2, ref2, atol=2e-3, rtol=2e-3), \
        float(jnp.max(jnp.abs(out2 - ref2)))

    # 3) Forced multi-step grid (exercises the batch-tiled path + edge block).
    x3 = jax.random.normal(k_x3, (40, OBS_DIM), jnp.float32)
    out3 = jax.block_until_ready(actor_forward(x3, packed, tile_b=16))
    ref3 = actor_reference(x3, params)
    assert out3.shape == (40, ACT_DIM)
    assert jnp.allclose(out3, ref3, atol=2e-3, rtol=2e-3), \
        float(jnp.max(jnp.abs(out3 - ref3)))

    print("KERNEL_OK")
</pallas_src>

<mosaic_0001>
module attributes {stable_mosaic.version = 11 : i64} {
  func.func @actor_kernel(%arg0: i32, %arg1: memref<16x16xf32, #tpu.memory_space<vmem>>, %arg2: memref<16x256xbf16, #tpu.memory_space<vmem>>, %arg3: memref<1x256xf32, #tpu.memory_space<vmem>>, %arg4: memref<256x256xbf16, #tpu.memory_space<vmem>>, %arg5: memref<1x256xf32, #tpu.memory_space<vmem>>, %arg6: memref<256x128xbf16, #tpu.memory_space<vmem>>, %arg7: memref<1x128xf32, #tpu.memory_space<vmem>>, %arg8: memref<1x128xf32, #tpu.memory_space<vmem>>, %arg9: memref<1x128xf32, #tpu.memory_space<vmem>>, %arg10: memref<16x128xf32, #tpu.memory_space<vmem>>) attributes {dimension_semantics = [#tpu.dimension_semantics<parallel>], iteration_bounds = array<i64: 1>, scalar_prefetch = 0 : i64, scratch_operands = 0 : i64, tpu.core_type = #tpu.core_type<tc>, window_params = [{transform_indices = @transform_0, window_bounds = array<i64: 16, 16>}, {pipeline_mode = #tpu.pipeline_mode<synchronous>, transform_indices = @transform_1, window_bounds = array<i64: 16, 256>}, {pipeline_mode = #tpu.pipeline_mode<synchronous>, transform_indices = @transform_2, window_bounds = array<i64: 1, 256>}, {pipeline_mode = #tpu.pipeline_mode<synchronous>, transform_indices = @transform_3, window_bounds = array<i64: 256, 256>}, {pipeline_mode = #tpu.pipeline_mode<synchronous>, transform_indices = @transform_4, window_bounds = array<i64: 1, 256>}, {pipeline_mode = #tpu.pipeline_mode<synchronous>, transform_indices = @transform_5, window_bounds = array<i64: 256, 128>}, {pipeline_mode = #tpu.pipeline_mode<synchronous>, transform_indices = @transform_6, window_bounds = array<i64: 1, 128>}, {pipeline_mode = #tpu.pipeline_mode<synchronous>, transform_indices = @transform_7, window_bounds = array<i64: 1, 128>}, {pipeline_mode = #tpu.pipeline_mode<synchronous>, transform_indices = @transform_8, window_bounds = array<i64: 1, 128>}, {transform_indices = @transform_9, window_bounds = array<i64: 16, 128>}]} {
    %c0 = arith.constant 0 : index
    %c0_0 = arith.constant 0 : index
    %0 = vector.load %arg1[%c0, %c0_0] : memref<16x16xf32, #tpu.memory_space<vmem>>, vector<16x16xf32>
    %1 = arith.truncf %0 : vector<16x16xf32> to vector<16x16xbf16>
    %c0_1 = arith.constant 0 : index
    %c0_2 = arith.constant 0 : index
    %2 = vector.load %arg2[%c0_1, %c0_2] : memref<16x256xbf16, #tpu.memory_space<vmem>>, vector<16x256xbf16>
    %cst = arith.constant dense<0.000000e+00> : vector<16x256xf32>
    %3 = tpu.matmul %1, %2, %cst {dimension_numbers = #tpu.dot_dimension_numbers<[1], [0], [0], [1], [0, 0, 1, 1], [], []>} : vector<16x16xbf16>, vector<16x256xbf16>, vector<16x256xf32> -> vector<16x256xf32>
    %c0_3 = arith.constant 0 : index
    %c0_4 = arith.constant 0 : index
    %4 = vector.load %arg3[%c0_3, %c0_4] : memref<1x256xf32, #tpu.memory_space<vmem>>, vector<1x256xf32>
    %5 = vector.broadcast %4 : vector<1x256xf32> to vector<16x256xf32>
    %6 = arith.addf %3, %5 : vector<16x256xf32>
    %cst_5 = arith.constant 0.000000e+00 : f32
    %7 = vector.broadcast %cst_5 : f32 to vector<16x256xf32>
    %8 = arith.maximumf %6, %7 : vector<16x256xf32>
    %9 = arith.truncf %8 : vector<16x256xf32> to vector<16x256xbf16>
    %c0_6 = arith.constant 0 : index
    %c0_7 = arith.constant 0 : index
    %10 = vector.load %arg4[%c0_6, %c0_7] : memref<256x256xbf16, #tpu.memory_space<vmem>>, vector<256x256xbf16>
    %cst_8 = arith.constant dense<0.000000e+00> : vector<16x256xf32>
    %11 = tpu.matmul %9, %10, %cst_8 {dimension_numbers = #tpu.dot_dimension_numbers<[1], [0], [0], [1], [0, 0, 1, 1], [], []>} : vector<16x256xbf16>, vector<256x256xbf16>, vector<16x256xf32> -> vector<16x256xf32>
    %c0_9 = arith.constant 0 : index
    %c0_10 = arith.constant 0 : index
    %12 = vector.load %arg5[%c0_9, %c0_10] : memref<1x256xf32, #tpu.memory_space<vmem>>, vector<1x256xf32>
    %13 = vector.broadcast %12 : vector<1x256xf32> to vector<16x256xf32>
    %14 = arith.addf %11, %13 : vector<16x256xf32>
    %cst_11 = arith.constant 0.000000e+00 : f32
    %15 = vector.broadcast %cst_11 : f32 to vector<16x256xf32>
    %16 = arith.maximumf %14, %15 : vector<16x256xf32>
    %17 = arith.truncf %16 : vector<16x256xf32> to vector<16x256xbf16>
    %c0_12 = arith.constant 0 : index
    %c0_13 = arith.constant 0 : index
    %18 = vector.load %arg6[%c0_12, %c0_13] : memref<256x128xbf16, #tpu.memory_space<vmem>>, vector<256x128xbf16>
    %cst_14 = arith.constant dense<0.000000e+00> : vector<16x128xf32>
    %19 = tpu.matmul %17, %18, %cst_14 {dimension_numbers = #tpu.dot_dimension_numbers<[1], [0], [0], [1], [0, 0, 1, 1], [], []>} : vector<16x256xbf16>, vector<256x128xbf16>, vector<16x128xf32> -> vector<16x128xf32>
    %c0_15 = arith.constant 0 : index
    %c0_16 = arith.constant 0 : index
    %20 = vector.load %arg7[%c0_15, %c0_16] : memref<1x128xf32, #tpu.memory_space<vmem>>, vector<1x128xf32>
    %21 = vector.broadcast %20 : vector<1x128xf32> to vector<16x128xf32>
    %22 = arith.addf %19, %21 : vector<16x128xf32>
    %23 = math.tanh %22 : vector<16x128xf32>
    %c0_17 = arith.constant 0 : index
    %c0_18 = arith.constant 0 : index
    %24 = vector.load %arg8[%c0_17, %c0_18] : memref<1x128xf32, #tpu.memory_space<vmem>>, vector<1x128xf32>
    %25 = vector.broadcast %24 : vector<1x128xf32> to vector<16x128xf32>
    %26 = arith.mulf %23, %25 : vector<16x128xf32>
    %c0_19 = arith.constant 0 : index
    %c0_20 = arith.constant 0 : index
    %27 = vector.load %arg9[%c0_19, %c0_20] : memref<1x128xf32, #tpu.memory_space<vmem>>, vector<1x128xf32>
    %28 = vector.broadcast %27 : vector<1x128xf32> to vector<16x128xf32>
    %29 = arith.addf %26, %28 : vector<16x128xf32>
    %c0_21 = arith.constant 0 : index
    %c0_22 = arith.constant 0 : index
    %30 = vector.load %arg10[%c0_21, %c0_22] : memref<16x128xf32, #tpu.memory_space<vmem>>, vector<16x128xf32>
    tpu.vector_store %arg10[%c0_21, %c0_22], %29 {strides = array<i32>} : memref<16x128xf32, #tpu.memory_space<vmem>>, vector<16x128xf32>,
    return
  }
  func.func @transform_0(%arg0: i32) -> (i32, i32) {
    %c0_i32 = arith.constant 0 : i32
    %c0_i32_0 = arith.constant 0 : i32
    return %arg0, %c0_i32 : i32, i32
  }
  func.func @transform_1(%arg0: i32) -> (i32, i32) {
    %c0_i32 = arith.constant 0 : i32
    %c0_i32_0 = arith.constant 0 : i32
    %c0_i32_1 = arith.constant 0 : i32
    return %c0_i32, %c0_i32_0 : i32, i32
  }
  func.func @transform_2(%arg0: i32) -> (i32, i32) {
    %c0_i32 = arith.constant 0 : i32
    %c0_i32_0 = arith.constant 0 : i32
    %c0_i32_1 = arith.constant 0 : i32
    return %c0_i32, %c0_i32_0 : i32, i32
  }
  func.func @transform_3(%arg0: i32) -> (i32, i32) {
    %c0_i32 = arith.constant 0 : i32
    %c0_i32_0 = arith.constant 0 : i32
    %c0_i32_1 = arith.constant 0 : i32
    return %c0_i32, %c0_i32_0 : i32, i32
  }
  func.func @transform_4(%arg0: i32) -> (i32, i32) {
    %c0_i32 = arith.constant 0 : i32
    %c0_i32_0 = arith.constant 0 : i32
    %c0_i32_1 = arith.constant 0 : i32
    return %c0_i32, %c0_i32_0 : i32, i32
  }
  func.func @transform_5(%arg0: i32) -> (i32, i32) {
    %c0_i32 = arith.constant 0 : i32
    %c0_i32_0 = arith.constant 0 : i32
    %c0_i32_1 = arith.constant 0 : i32
    return %c0_i32, %c0_i32_0 : i32, i32
  }
  func.func @transform_6(%arg0: i32) -> (i32, i32) {
    %c0_i32 = arith.constant 0 : i32
    %c0_i32_0 = arith.constant 0 : i32
    %c0_i32_1 = arith.constant 0 : i32
    return %c0_i32, %c0_i32_0 : i32, i32
  }
  func.func @transform_7(%arg0: i32) -> (i32, i32) {
    %c0_i32 = arith.constant 0 : i32
    %c0_i32_0 = arith.constant 0 : i32
    %c0_i32_1 = arith.constant 0 : i32
    return %c0_i32, %c0_i32_0 : i32, i32
  }
  func.func @transform_8(%arg0: i32) -> (i32, i32) {
    %c0_i32 = arith.constant 0 : i32
    %c0_i32_0 = arith.constant 0 : i32
    %c0_i32_1 = arith.constant 0 : i32
    return %c0_i32, %c0_i32_0 : i32, i32
  }
  func.func @transform_9(%arg0: i32) -> (i32, i32) {
    %c0_i32 = arith.constant 0 : i32
    %c0_i32_0 = arith.constant 0 : i32
    return %arg0, %c0_i32 : i32, i32
  }
}

</mosaic_0001>

<llo_original>
// kernel: tpu_custom_call.1
$region0: #{tpu_custom_call.1}
  #allocation0 [shape = 'u32[]', space=smem, size = 0x4, offset = 0x4, fixed_abs, tag = 'smem constant byte address 0x4 - core index']
  #allocation1 [shape = 'u32[72,128]{1,0:T(1,128)}', space=vmem, size = 0x9000, scoped, tag = 'internal scratch']
  %s0 = inlined_call_operand.hbm [shape: f32[8,16], index: 0, kind: input, shape index: {}]
  %s1 = inlined_call_operand.hbm [shape: bf16[16,256], index: 1, kind: input, shape index: {}]
  %s2 = inlined_call_operand.hbm [shape: f32[1,256], index: 2, kind: input, shape index: {}]
  %s3 = inlined_call_operand.hbm [shape: bf16[256,256], index: 3, kind: input, shape index: {}]
  %s4 = inlined_call_operand.vmem [shape: f32[1,256], index: 4, kind: input, shape index: {}]
  %s5 = inlined_call_operand.hbm [shape: bf16[256,128], index: 5, kind: input, shape index: {}]
  %s6 = inlined_call_operand.vmem [shape: f32[1,128], index: 6, kind: input, shape index: {}]
  %s7 = inlined_call_operand.vmem [shape: f32[1,128], index: 7, kind: input, shape index: {}]
  %s8 = inlined_call_operand.vmem [shape: f32[1,128], index: 8, kind: input, shape index: {}]
  %s9 = inlined_call_operand.hbm [shape: f32[8,128], index: 9, kind: output, shape index: {}]
  %s10 = sld [smem:[#allocation0]]
  $region66: #{tpu_custom_call.1} parent=0
    _
  %s12 = ssub.s32 1, %s10
  %s13 = scalar_select 0, %s12, %s10
  $region1: #{tpu_custom_call.1} parent=0
    #allocation2 [shape = 'u8[8192]{0}', space=vmem, size = 0x2000, scoped, tag = 'input window, operand 0, single buffered']
    #allocation3 [shape = 's32[1]{0}', space=sflag, size = 0x4, scoped, tag = 'scoped memory for tpu_custom_call.1']
    #allocation4 [shape = 's32[1]{0}', space=sflag, size = 0x4, scoped, tag = 'scoped memory for tpu_custom_call.1']
    #allocation5 [shape = 'u8[8192]{0}', space=vmem, size = 0x2000, scoped, tag = 'input window, operand 1, single buffered']
    #allocation6 [shape = 's32[1]{0}', space=sflag, size = 0x4, scoped, tag = 'scoped memory for tpu_custom_call.1']
    #allocation7 [shape = 'u8[1024]{0}', space=vmem, size = 0x400, scoped, tag = 'input window, operand 2, single buffered']
    #allocation8 [shape = 'u8[131072]{0}', space=vmem, size = 0x20000, scoped, tag = 'input window, operand 3, single buffered']
    #allocation9 [shape = 's32[1]{0}', space=sflag, size = 0x4, scoped, tag = 'scoped memory for tpu_custom_call.1']
    #allocation10 [shape = 'u8[65536]{0}', space=vmem, size = 0x10000, scoped, tag = 'input window, operand 5, single buffered']
    #allocation11 [shape = 'u8[8192]{0}', space=vmem, size = 0x2000, scoped, tag = 'output window, operand 0, single buffered']
    %14 = vsyncpa [#allocation3], 0
    %15 = vsyncpa [#allocation6], 0
    %16 = vsyncpa [#allocation9], 0
    %17 = vsyncpa [#allocation4], 0
    // Predicated region
    $region2: #{tpu_custom_call.1} parent=1 // pred_check
      _
    $region3: #{tpu_custom_call.1} parent=1 // pred_check_branch
      %19 = sbr.rel (0) target = $region5
    $region4: #{tpu_custom_call.1} parent=1 // pred_region
      %21 = vsyncadd [#allocation3], 128
      %s22 = sshll.u32 %s0, 4
      %s23 = int_to_ptr.hbm [resolvable:$true] %s22
      %s24 = sshll.u32 [#allocation2], 4
      %s25 = int_to_ptr.vmem [resolvable:$true] %s24
      %30 = dma.hbm_to_vmem [thread:$0]  %s23, 128, %s25, [#allocation3], 128, 128, 8
    $region5: #{tpu_custom_call.1} parent=1 // pred_fallthru
      _
    // Predicated region
    $region6: #{tpu_custom_call.1} parent=1 // pred_check
      _
    $region7: #{tpu_custom_call.1} parent=1 // pred_check_branch
      %32 = sbr.rel (0) target = $region9
    $region8: #{tpu_custom_call.1} parent=1 // pred_region
      %34 = vsyncadd [#allocation6], 0
      %s35 = sshll.u32 %s1, 4
      %s36 = int_to_ptr.hbm [resolvable:$true] %s35
      %s37 = sshll.u32 [#allocation5], 4
      %s38 = int_to_ptr.vmem [resolvable:$true] %s37
      %43 = dma.hbm_to_vmem [thread:$0]  %s36, 256, %s38, [#allocation6], 128, 128, 8
    $region9: #{tpu_custom_call.1} parent=1 // pred_fallthru
      _
    // Predicated region
    $region10: #{tpu_custom_call.1} parent=1 // pred_check
      _
    $region11: #{tpu_custom_call.1} parent=1 // pred_check_branch
      %45 = sbr.rel (0) target = $region13
    $region12: #{tpu_custom_call.1} parent=1 // pred_region
      %47 = vsyncadd [#allocation6], 0
      %s49 = sshll.u32 %s2, 4
      %s50 = int_to_ptr.hbm [resolvable:$true] %s49
      %s51 = sshll.u32 [#allocation7], 4
      %s52 = int_to_ptr.vmem [resolvable:$true] %s51
      %54 = dma.hbm_to_vmem [thread:$0]  %s50, 32, %s52, [#allocation6]
    $region13: #{tpu_custom_call.1} parent=1 // pred_fallthru
      _
    // Predicated region
    $region14: #{tpu_custom_call.1} parent=1 // pred_check
      _
    $region15: #{tpu_custom_call.1} parent=1 // pred_check_branch
      %56 = sbr.rel (0) target = $region17
    $region16: #{tpu_custom_call.1} parent=1 // pred_region
      %58 = vsyncadd [#allocation9], 0
      %s59 = sshll.u32 %s3, 4
      %s60 = int_to_ptr.hbm [resolvable:$true] %s59
      %s61 = sshll.u32 [#allocation8], 4
      %s62 = int_to_ptr.vmem [resolvable:$true] %s61
      %67 = dma.hbm_to_vmem [thread:$0]  %s60, 4096, %s62, [#allocation9], 128, 128, 8
    $region17: #{tpu_custom_call.1} parent=1 // pred_fallthru
      _
    // Predicated region
    $region18: #{tpu_custom_call.1} parent=1 // pred_check
      _
    $region19: #{tpu_custom_call.1} parent=1 // pred_check_branch
      %69 = sbr.rel (0) target = $region21
    $region20: #{tpu_custom_call.1} parent=1 // pred_region
      _
    $region21: #{tpu_custom_call.1} parent=1 // pred_fallthru
      _
    // Predicated region
    $region22: #{tpu_custom_call.1} parent=1 // pred_check
      _
    $region23: #{tpu_custom_call.1} parent=1 // pred_check_branch
      %71 = sbr.rel (0) target = $region25
    $region24: #{tpu_custom_call.1} parent=1 // pred_region
      %73 = vsyncadd [#allocation9], 0
      %s74 = sshll.u32 %s5, 4
      %s75 = int_to_ptr.hbm [resolvable:$true] %s74
      %s76 = sshll.u32 [#allocation10], 4
      %s77 = int_to_ptr.vmem [resolvable:$true] %s76
      %82 = dma.hbm_to_vmem [thread:$0]  %s75, 2048, %s77, [#allocation9], 64, 64, 4
    $region25: #{tpu_custom_call.1} parent=1 // pred_fallthru
      _
    // Predicated region
    $region26: #{tpu_custom_call.1} parent=1 // pred_check
      _
    $region27: #{tpu_custom_call.1} parent=1 // pred_check_branch
      %84 = sbr.rel (0) target = $region29
    $region28: #{tpu_custom_call.1} parent=1 // pred_region
      _
    $region29: #{tpu_custom_call.1} parent=1 // pred_fallthru
      _
    // Predicated region
    $region30: #{tpu_custom_call.1} parent=1 // pred_check
      _
    $region31: #{tpu_custom_call.1} parent=1 // pred_check_branch
      %86 = sbr.rel (0) target = $region33
    $region32: #{tpu_custom_call.1} parent=1 // pred_region
      _
    $region33: #{tpu_custom_call.1} parent=1 // pred_fallthru
      _
    // Predicated region
    $region34: #{tpu_custom_call.1} parent=1 // pred_check
      _
    $region35: #{tpu_custom_call.1} parent=1 // pred_check_branch
      %88 = sbr.rel (0) target = $region37
    $region36: #{tpu_custom_call.1} parent=1 // pred_region
      _
    $region37: #{tpu_custom_call.1} parent=1 // pred_fallthru
      _
    // Predicated region
    $region38: #{tpu_custom_call.1} parent=1 // pred_check
      _
    $region39: #{tpu_custom_call.1} parent=1 // pred_check_branch
      %90 = sbr.rel (0) target = $region41
    $region40: #{tpu_custom_call.1} parent=1 // pred_region
      %92 = dma.done [#allocation3], 256
    $region41: #{tpu_custom_call.1} parent=1 // pred_fallthru
      _
    // Predicated region
    $region42: #{tpu_custom_call.1} parent=1 // pred_check
      _
    $region43: #{tpu_custom_call.1} parent=1 // pred_check_branch
      %94 = sbr.rel (0) target = $region45
    $region44: #{tpu_custom_call.1} parent=1 // pred_region
      %96 = dma.done [#allocation6], 256
    $region45: #{tpu_custom_call.1} parent=1 // pred_fallthru
      _
    // Predicated region
    $region46: #{tpu_custom_call.1} parent=1 // pred_check
      _
    $region47: #{tpu_custom_call.1} parent=1 // pred_check_branch
      %98 = sbr.rel (0) target = $region49
    $region48: #{tpu_custom_call.1} parent=1 // pred_region
      %100 = dma.done [#allocation6], 32
    $region49: #{tpu_custom_call.1} parent=1 // pred_fallthru
      _
    // Predicated region
    $region50: #{tpu_custom_call.1} parent=1 // pred_check
      _
    $region51: #{tpu_custom_call.1} parent=1 // pred_check_branch
      %102 = sbr.rel (0) target = $region53
    $region52: #{tpu_custom_call.1} parent=1 // pred_region
      %104 = dma.done [#allocation9], 4096
    $region53: #{tpu_custom_call.1} parent=1 // pred_fallthru
      _
    // Predicated region
    $region54: #{tpu_custom_call.1} parent=1 // pred_check
      _
    $region55: #{tpu_custom_call.1} parent=1 // pred_check_branch
      %106 = sbr.rel (0) target = $region57
    $region56: #{tpu_custom_call.1} parent=1 // pred_region
      %108 = dma.done [#allocation9], 2048
    $region57: #{tpu_custom_call.1} parent=1 // pred_fallthru
      _
    %v110 = vld [vmem:[#allocation2] sm:$0xff]
    %v111 = vld [vmem:[#allocation2 + $0x8] sm:$0xff]
    %v112 = vpack.c.bf16 %v111, %v110
    %v113 = vld [vmem:[#allocation5] sm:$0xff]
    %v114 = vld [vmem:[#allocation5 + $0x8] sm:$0xff]
    %v115 = vld [vmem:[#allocation7] sm:$0x3]
    %v117 = vperm.slane %v115, 0
    %v118 = vperm.slane %v115, 1
    %v123 = vunpack.c.l.b16 %v113
    %v124 = vunpack.c.h.b16 %v113
    %v125 = vunpack.c.l.b16 %v114
    %v126 = vunpack.c.h.b16 %v114
    %v127 = vpack.c.b16 %v125, %v123
    %v128 = vpack.c.b16 %v126, %v124
    %vm131 = vcmask 130048
    %v133 = vsel %vm131, %v112, 0
    %135 = vmatpush.bf16.msra.mxu0 0
    %136 = vmatpush.bf16.msra.mxu0 0
    %137 = vmatpush.bf16.msra.mxu0 0
    %138 = vmatpush.bf16.msra.mxu0 0
    %139 = vmatpush.bf16.msra.mxu0 0
    %140 = vmatpush.bf16.msra.mxu0 0
    %141 = vmatpush.bf16.msra.mxu0 0
    %142 = vmatpush.bf16.msra.mxu0 %v127
    %143 = vmatmul.bf16.gmra.mxu0 %v133
    %v144 = vpop.f32.mrf.mxu0
    %v145 = vadd.f32 %v117, %v144
    %v146 = vpop.f32.mrf.mxu0
    %v147 = vadd.f32 %v117, %v146
    %148 = vdwg.mxu0
    %149 = vmatpush.bf16.msra.mxu0 0
    %150 = vmatpush.bf16.msra.mxu0 0
    %151 = vmatpush.bf16.msra.mxu0 0
    %152 = vmatpush.bf16.msra.mxu0 0
    %153 = vmatpush.bf16.msra.mxu0 0
    %154 = vmatpush.bf16.msra.mxu0 0
    %155 = vmatpush.bf16.msra.mxu0 0
    %156 = vmatpush.bf16.msra.mxu0 %v128
    %157 = vmatmul.bf16.gmra.mxu0 %v133
    %v158 = vpop.f32.mrf.mxu0
    %v159 = vadd.f32 %v118, %v158
    %v160 = vpop.f32.mrf.mxu0
    %v161 = vadd.f32 %v118, %v160
    %162 = vdwg.mxu0
    %v163 = vmax.f32 %v145, 0.0
    %v164 = vmax.f32 %v159, 0.0
    %v165 = vmax.f32 %v147, 0.0
    %v166 = vmax.f32 %v161, 0.0
    %v167 = vpack.c.bf16 %v165, %v163
    %v168 = vpack.c.bf16 %v166, %v164
    %v169 = vld [vmem:[#allocation8] sm:$0xff]
    %v170 = vld [vmem:[#allocation8 + $0x8] sm:$0xff]
    %v171 = vld [vmem:[#allocation8 + $0x10] sm:$0xff]
    %v172 = vld [vmem:[#allocation8 + $0x18] sm:$0xff]
    %v173 = vld [vmem:[#allocation8 + $0x20] sm:$0xff]
    %v174 = vld [vmem:[#allocation8 + $0x28] sm:$0xff]
    %v175 = vld [vmem:[#allocation8 + $0x30] sm:$0xff]
    %v176 = vld [vmem:[#allocation8 + $0x38] sm:$0xff]
    %v177 = vld [vmem:[#allocation8 + $0x40] sm:$0xff]
    %v178 = vld [vmem:[#allocation8 + $0x48] sm:$0xff]
    %v179 = vld [vmem:[#allocation8 + $0x50] sm:$0xff]
    %v180 = vld [vmem:[#allocation8 + $0x58] sm:$0xff]
    %v181 = vld [vmem:[#allocation8 + $0x60] sm:$0xff]
    %v182 = vld [vmem:[#allocation8 + $0x68] sm:$0xff]
    %v183 = vld [vmem:[#allocation8 + $0x70] sm:$0xff]
    %v184 = vld [vmem:[#allocation8 + $0x78] sm:$0xff]
    %v185 = vld [vmem:[#allocation8 + $0x80] sm:$0xff]
    %v186 = vld [vmem:[#allocation8 + $0x88] sm:$0xff]
    %v187 = vld [vmem:[#allocation8 + $0x90] sm:$0xff]
    %v188 = vld [vmem:[#allocation8 + $0x98] sm:$0xff]
    %v189 = vld [vmem:[#allocation8 + $0xa0] sm:$0xff]
    %v190 = vld [vmem:[#allocation8 + $0xa8] sm:$0xff]
    %v191 = vld [vmem:[#allocation8 + $0xb0] sm:$0xff]
    %v192 = vld [vmem:[#allocation8 + $0xb8] sm:$0xff]
    %v193 = vld [vmem:[#allocation8 + $0xc0] sm:$0xff]
    %v194 = vld [vmem:[#allocation8 + $0xc8] sm:$0xff]
    %v195 = vld [vmem:[#allocation8 + $0xd0] sm:$0xff]
    %v196 = vld [vmem:[#allocation8 + $0xd8] sm:$0xff]
    %v197 = vld [vmem:[#allocation8 + $0xe0] sm:$0xff]
    %v198 = vld [vmem:[#allocation8 + $0xe8] sm:$0xff]
    %v199 = vld [vmem:[#allocation8 + $0xf0] sm:$0xff]
    %v200 = vld [vmem:[#allocation8 + $0xf8] sm:$0xff]
    %v201 = vld [vmem:[%s4] sm:$0x3]
    %v203 = vperm.slane %v201, 0
    %v204 = vperm.slane %v201, 1
    %v239 = vunpack.c.l.b16 %v169
    %v240 = vunpack.c.h.b16 %v169
    %v241 = vunpack.c.l.b16 %v170
    %v242 = vunpack.c.h.b16 %v170
    %v243 = vunpack.c.l.b16 %v171
    %v244 = vunpack.c.h.b16 %v171
    %v245 = vunpack.c.l.b16 %v172
    %v246 = vunpack.c.h.b16 %v172
    %v247 = vunpack.c.l.b16 %v173
    %v248 = vunpack.c.h.b16 %v173
    %v249 = vunpack.c.l.b16 %v174
    %v250 = vunpack.c.h.b16 %v174
    %v251 = vunpack.c.l.b16 %v175
    %v252 = vunpack.c.h.b16 %v175
    %v253 = vunpack.c.l.b16 %v176
    %v254 = vunpack.c.h.b16 %v176
    %v255 = vunpack.c.l.b16 %v177
    %v256 = vunpack.c.h.b16 %v177
    %v257 = vunpack.c.l.b16 %v178
    %v258 = vunpack.c.h.b16 %v178
    %v259 = vunpack.c.l.b16 %v179
    %v260 = vunpack.c.h.b16 %v179
    %v261 = vunpack.c.l.b16 %v180
    %v262 = vunpack.c.h.b16 %v180
    %v263 = vunpack.c.l.b16 %v181
    %v264 = vunpack.c.h.b16 %v181
    %v265 = vunpack.c.l.b16 %v182
    %v266 = vunpack.c.h.b16 %v182
    %v267 = vunpack.c.l.b16 %v183
    %v268 = vunpack.c.h.b16 %v183
    %v269 = vunpack.c.l.b16 %v184
    %v270 = vunpack.c.h.b16 %v184
    %v271 = vunpack.c.l.b16 %v185
    %v272 = vunpack.c.h.b16 %v185
    %v273 = vunpack.c.l.b16 %v186
    %v274 = vunpack.c.h.b16 %v186
    %v275 = vunpack.c.l.b16 %v187
    %v276 = vunpack.c.h.b16 %v187
    %v277 = vunpack.c.l.b16 %v188
    %v278 = vunpack.c.h.b16 %v188
    %v279 = vunpack.c.l.b16 %v189
    %v280 = vunpack.c.h.b16 %v189
    %v281 = vunpack.c.l.b16 %v190
    %v282 = vunpack.c.h.b16 %v190
    %v283 = vunpack.c.l.b16 %v191
    %v284 = vunpack.c.h.b16 %v191
    %v285 = vunpack.c.l.b16 %v192
    %v286 = vunpack.c.h.b16 %v192
    %v287 = vunpack.c.l.b16 %v193
    %v288 = vunpack.c.h.b16 %v193
    %v289 = vunpack.c.l.b16 %v194
    %v290 = vunpack.c.h.b16 %v194
    %v291 = vunpack.c.l.b16 %v195
    %v292 = vunpack.c.h.b16 %v195
    %v293 = vunpack.c.l.b16 %v196
    %v294 = vunpack.c.h.b16 %v196
    %v295 = vunpack.c.l.b16 %v197
    %v296 = vunpack.c.h.b16 %v197
    %v297 = vunpack.c.l.b16 %v198
    %v298 = vunpack.c.h.b16 %v198
    %v299 = vunpack.c.l.b16 %v199
    %v300 = vunpack.c.h.b16 %v199
    %v301 = vunpack.c.l.b16 %v200
    %v302 = vunpack.c.h.b16 %v200
    %v303 = vpack.c.b16 %v241, %v239
    %v304 = vpack.c.b16 %v242, %v240
    %v305 = vpack.c.b16 %v245, %v243
    %v306 = vpack.c.b16 %v246, %v244
    %v307 = vpack.c.b16 %v249, %v247
    %v308 = vpack.c.b16 %v250, %v248
    %v309 = vpack.c.b16 %v253, %v251
    %v310 = vpack.c.b16 %v254, %v252
    %v311 = vpack.c.b16 %v257, %v255
    %v312 = vpack.c.b16 %v258, %v256
    %v313 = vpack.c.b16 %v261, %v259
    %v314 = vpack.c.b16 %v262, %v260
    %v315 = vpack.c.b16 %v265, %v263
    %v316 = vpack.c.b16 %v266, %v264
    %v317 = vpack.c.b16 %v269, %v267
    %v318 = vpack.c.b16 %v270, %v268
    %v319 = vpack.c.b16 %v273, %v271
    %v320 = vpack.c.b16 %v274, %v272
    %v321 = vpack.c.b16 %v277, %v275
    %v322 = vpack.c.b16 %v278, %v276
    %v323 = vpack.c.b16 %v281, %v279
    %v324 = vpack.c.b16 %v282, %v280
    %v325 = vpack.c.b16 %v285, %v283
    %v326 = vpack.c.b16 %v286, %v284
    %v327 = vpack.c.b16 %v289, %v287
    %v328 = vpack.c.b16 %v290, %v288
    %v329 = vpack.c.b16 %v293, %v291
    %v330 = vpack.c.b16 %v294, %v292
    %v331 = vpack.c.b16 %v297, %v295
    %v332 = vpack.c.b16 %v298, %v296
    %v333 = vpack.c.b16 %v301, %v299
    %v334 = vpack.c.b16 %v302, %v300
    %367 = vmatpush.bf16.msra.mxu0 %v317
    %368 = vmatpush.bf16.msra.mxu0 %v315
    %369 = vmatpush.bf16.msra.mxu0 %v313
    %370 = vmatpush.bf16.msra.mxu0 %v311
    %371 = vmatpush.bf16.msra.mxu0 %v309
    %372 = vmatpush.bf16.msra.mxu0 %v307
    %373 = vmatpush.bf16.msra.mxu0 %v305
    %374 = vmatpush.bf16.msra.mxu0 %v303
    %375 = vmatmul.bf16.gmra.mxu0 %v167
    %v376 = vpop.f32.mrf.mxu0
    %v377 = vadd.f32 %v203, %v376
    %v378 = vpop.f32.mrf.mxu0
    %v379 = vadd.f32 %v203, %v378
    %380 = vdwg.mxu0
    %381 = vmatpush.bf16.msra.mxu0 %v333
    %382 = vmatpush.bf16.msra.mxu0 %v331
    %383 = vmatpush.bf16.msra.mxu0 %v329
    %384 = vmatpush.bf16.msra.mxu0 %v327
    %385 = vmatpush.bf16.msra.mxu0 %v325
    %386 = vmatpush.bf16.msra.mxu0 %v323
    %387 = vmatpush.bf16.msra.mxu0 %v321
    %388 = vmatpush.bf16.msra.mxu0 %v319
    %389 = vmatmul.bf16.gmra.mxu0 %v168
    %v390 = vpop.f32.mrf.mxu0
    %v391 = vadd.f32 %v377, %v390
    %v392 = vpop.f32.mrf.mxu0
    %v393 = vadd.f32 %v379, %v392
    %394 = vdwg.mxu0
    %395 = vmatpush.bf16.msra.mxu0 %v318
    %396 = vmatpush.bf16.msra.mxu0 %v316
    %397 = vmatpush.bf16.msra.mxu0 %v314
    %398 = vmatpush.bf16.msra.mxu0 %v312
    %399 = vmatpush.bf16.msra.mxu0 %v310
    %400 = vmatpush.bf16.msra.mxu0 %v308
    %401 = vmatpush.bf16.msra.mxu0 %v306
    %402 = vmatpush.bf16.msra.mxu0 %v304
    %403 = vmatmul.bf16.gmra.mxu0 %v167
    %v404 = vpop.f32.mrf.mxu0
    %v405 = vadd.f32 %v204, %v404
    %v406 = vpop.f32.mrf.mxu0
    %v407 = vadd.f32 %v204, %v406
    %408 = vdwg.mxu0
    %409 = vmatpush.bf16.msra.mxu0 %v334
    %410 = vmatpush.bf16.msra.mxu0 %v332
    %411 = vmatpush.bf16.msra.mxu0 %v330
    %412 = vmatpush.bf16.msra.mxu0 %v328
    %413 = vmatpush.bf16.msra.mxu0 %v326
    %414 = vmatpush.bf16.msra.mxu0 %v324
    %415 = vmatpush.bf16.msra.mxu0 %v322
    %416 = vmatpush.bf16.msra.mxu0 %v320
    %417 = vmatmul.bf16.gmra.mxu0 %v168
    %v418 = vpop.f32.mrf.mxu0
    %v419 = vadd.f32 %v405, %v418
    %v420 = vpop.f32.mrf.mxu0
    %v421 = vadd.f32 %v407, %v420
    %422 = vdwg.mxu0
    %v423 = vmax.f32 %v391, 0.0
    %v424 = vmax.f32 %v419, 0.0
    %v425 = vmax.f32 %v393, 0.0
    %v426 = vmax.f32 %v421, 0.0
    %v427 = vpack.c.bf16 %v425, %v423
    %v428 = vpack.c.bf16 %v426, %v424
    %v429 = vld [vmem:[#allocation10] sm:$0xf]
    %v430 = vld [vmem:[#allocation10 + $0x4] sm:$0xf]
    %v431 = vld [vmem:[#allocation10 + $0x8] sm:$0xf]
    %v432 = vld [vmem:[#allocation10 + $0xc] sm:$0xf]
    %v433 = vld [vmem:[#allocation10 + $0x10] sm:$0xf]
    %v434 = vld [vmem:[#allocation10 + $0x14] sm:$0xf]
    %v435 = vld [vmem:[#allocation10 + $0x18] sm:$0xf]
    %v436 = vld [vmem:[#allocation10 + $0x1c] sm:$0xf]
    %v437 = vld [vmem:[#allocation10 + $0x20] sm:$0xf]
    %v438 = vld [vmem:[#allocation10 + $0x24] sm:$0xf]
    %v439 = vld [vmem:[#allocation10 + $0x28] sm:$0xf]
    %v440 = vld [vmem:[#allocation10 + $0x2c] sm:$0xf]
    %v441 = vld [vmem:[#allocation10 + $0x30] sm:$0xf]
    %v442 = vld [vmem:[#allocation10 + $0x34] sm:$0xf]
    %v443 = vld [vmem:[#allocation10 + $0x38] sm:$0xf]
    %v444 = vld [vmem:[#allocation10 + $0x3c] sm:$0xf]
    %v445 = vld [vmem:[#allocation10 + $0x40] sm:$0xf]
    %v446 = vld [vmem:[#allocation10 + $0x44] sm:$0xf]
    %v447 = vld [vmem:[#allocation10 + $0x48] sm:$0xf]
    %v448 = vld [vmem:[#allocation10 + $0x4c] sm:$0xf]
    %v449 = vld [vmem:[#allocation10 + $0x50] sm:$0xf]
    %v450 = vld [vmem:[#allocation10 + $0x54] sm:$0xf]
    %v451 = vld [vmem:[#allocation10 + $0x58] sm:$0xf]
    %v452 = vld [vmem:[#allocation10 + $0x5c] sm:$0xf]
    %v453 = vld [vmem:[#allocation10 + $0x60] sm:$0xf]
    %v454 = vld [vmem:[#allocation10 + $0x64] sm:$0xf]
    %v455 = vld [vmem:[#allocation10 + $0x68] sm:$0xf]
    %v456 = vld [vmem:[#allocation10 + $0x6c] sm:$0xf]
    %v457 = vld [vmem:[#allocation10 + $0x70] sm:$0xf]
    %v458 = vld [vmem:[#allocation10 + $0x74] sm:$0xf]
    %v459 = vld [vmem:[#allocation10 + $0x78] sm:$0xf]
    %v460 = vld [vmem:[#allocation10 + $0x7c] sm:$0xf]
    %v461 = vld [vmem:[%s6] sm:$0x1]
    %v463 = vperm.slane %v461, 0
    %v497 = vunpack.c.l.b16 %v429
    %v498 = vunpack.c.l.b16 %v430
    %v499 = vunpack.c.l.b16 %v431
    %v500 = vunpack.c.l.b16 %v432
    %v501 = vunpack.c.l.b16 %v433
    %v502 = vunpack.c.l.b16 %v434
    %v503 = vunpack.c.l.b16 %v435
    %v504 = vunpack.c.l.b16 %v436
    %v505 = vunpack.c.l.b16 %v437
    %v506 = vunpack.c.l.b16 %v438
    %v507 = vunpack.c.l.b16 %v439
    %v508 = vunpack.c.l.b16 %v440
    %v509 = vunpack.c.l.b16 %v441
    %v510 = vunpack.c.l.b16 %v442
    %v511 = vunpack.c.l.b16 %v443
    %v512 = vunpack.c.l.b16 %v444
    %v513 = vunpack.c.l.b16 %v445
    %v514 = vunpack.c.l.b16 %v446
    %v515 = vunpack.c.l.b16 %v447
    %v516 = vunpack.c.l.b16 %v448
    %v517 = vunpack.c.l.b16 %v449
    %v518 = vunpack.c.l.b16 %v450
    %v519 = vunpack.c.l.b16 %v451
    %v520 = vunpack.c.l.b16 %v452
    %v521 = vunpack.c.l.b16 %v453
    %v522 = vunpack.c.l.b16 %v454
    %v523 = vunpack.c.l.b16 %v455
    %v524 = vunpack.c.l.b16 %v456
    %v525 = vunpack.c.l.b16 %v457
    %v526 = vunpack.c.l.b16 %v458
    %v527 = vunpack.c.l.b16 %v459
    %v528 = vunpack.c.l.b16 %v460
    %v529 = vpack.c.b16 %v498, %v497
    %v530 = vpack.c.b16 %v500, %v499
    %v531 = vpack.c.b16 %v502, %v501
    %v532 = vpack.c.b16 %v504, %v503
    %v533 = vpack.c.b16 %v506, %v505
    %v534 = vpack.c.b16 %v508, %v507
    %v535 = vpack.c.b16 %v510, %v509
    %v536 = vpack.c.b16 %v512, %v511
    %v537 = vpack.c.b16 %v514, %v513
    %v538 = vpack.c.b16 %v516, %v515
    %v539 = vpack.c.b16 %v518, %v517
    %v540 = vpack.c.b16 %v520, %v519
    %v541 = vpack.c.b16 %v522, %v521
    %v542 = vpack.c.b16 %v524, %v523
    %v543 = vpack.c.b16 %v526, %v525
    %v544 = vpack.c.b16 %v528, %v527
    %561 = vmatpush.bf16.msra.mxu0 %v536
    %562 = vmatpush.bf16.msra.mxu0 %v535
    %563 = vmatpush.bf16.msra.mxu0 %v534
    %564 = vmatpush.bf16.msra.mxu0 %v533
    %565 = vmatpush.bf16.msra.mxu0 %v532
    %566 = vmatpush.bf16.msra.mxu0 %v531
    %567 = vmatpush.bf16.msra.mxu0 %v530
    %568 = vmatpush.bf16.msra.mxu0 %v529
    %569 = vmatmul.bf16.gmra.mxu0 %v427
    %v570 = vpop.f32.mrf.mxu0
    %v571 = vadd.f32 %v463, %v570
    %v572 = vpop.f32.mrf.mxu0
    %v573 = vadd.f32 %v463, %v572
    %574 = vdwg.mxu0
    %575 = vmatpush.bf16.msra.mxu0 %v544
    %576 = vmatpush.bf16.msra.mxu0 %v543
    %577 = vmatpush.bf16.msra.mxu0 %v542
    %578 = vmatpush.bf16.msra.mxu0 %v541
    %579 = vmatpush.bf16.msra.mxu0 %v540
    %580 = vmatpush.bf16.msra.mxu0 %v539
    %581 = vmatpush.bf16.msra.mxu0 %v538
    %582 = vmatpush.bf16.msra.mxu0 %v537
    %583 = vmatmul.bf16.gmra.mxu0 %v428
    %v584 = vpop.f32.mrf.mxu0
    %v585 = vadd.f32 %v571, %v584
    %v586 = vpop.f32.mrf.mxu0
    %v587 = vadd.f32 %v573, %v586
    %588 = vdwg.mxu0
    %v589 = vtanh.pop %v585
    %v590 = vtanh.pop %v587
    %v591 = vld [vmem:[%s7] sm:$0x1]
    %v593 = vperm.slane %v591, 0
    %v595 = vmul.f32 %v589, %v593
    %v596 = vmul.f32 %v590, %v593
    %v597 = vld [vmem:[%s8] sm:$0x1]
    %v599 = vperm.slane %v597, 0
    %v601 = vadd.f32 %v595, %v599
    %v602 = vadd.f32 %v596, %v599
    %603 = vst [vmem:[#allocation11] sm:$0xff] %v601
    %604 = vst [vmem:[#allocation11 + $0x8] sm:$0xff] %v602
    // Predicated region
    $region58: #{tpu_custom_call.1} parent=1 // pred_check
      _
    $region59: #{tpu_custom_call.1} parent=1 // pred_check_branch
      %606 = sbr.rel (0) target = $region61
    $region60: #{tpu_custom_call.1} parent=1 // pred_region
      %608 = vsyncadd [#allocation4], 128
      %s609 = sshll.u32 [#allocation11], 4
      %s610 = int_to_ptr.vmem [resolvable:$true] %s609
      %s611 = sshll.u32 %s9, 4
      %s612 = int_to_ptr.hbm [resolvable:$true] %s611
      %617 = dma.vmem_to_hbm [thread:$0]  %s610, 128, %s612, [#allocation4], 128, 128, 8
    $region61: #{tpu_custom_call.1} parent=1 // pred_fallthru
      _
    // Predicated region
    $region62: #{tpu_custom_call.1} parent=1 // pred_check
      _
    $region63: #{tpu_custom_call.1} parent=1 // pred_check_branch
      %619 = sbr.rel (0) target = $region65
    $region64: #{tpu_custom_call.1} parent=1 // pred_region
      %621 = dma.done [#allocation4], 256
    $region65: #{tpu_custom_call.1} parent=1 // pred_fallthru
      _
    %622 = vsyncpa [#allocation3], 1
    %623 = vsyncpa [#allocation6], 1
    %624 = vsyncpa [#allocation9], 1
    %625 = vsyncpa [#allocation4], 1

</llo_original>
